<compile_context>
chip_gen: v5e
topology: v5e:2x2
jax: 0.10.0
libtpu: 0.0.40
codegen_flags: <defaults>
</compile_context>

<pallas_src>
import jax
import jax.numpy as jnp
from jax.experimental import pallas as pl
from jax.experimental.pallas import tpu as pltpu


def _input_conv_skip_kernel(x_ref, sc_ref, w_ref, b_ref, s12_ref, s2_ref,
                            t12_ref, o_ref):
    # x_ref : (TB, Cin,  TL)   TB batch elements, TL positions (lane dim)
    # sc_ref: (TB, Cout, TL)   skip-connection tile
    # w_ref : (Cout, Cin)      Conv1d(kernel_size=1) weight
    # b_ref, s12_ref, s2_ref, t12_ref : (Cout, 1) per-channel constants
    w = w_ref[...]
    b = b_ref[...]
    s12 = s12_ref[...]
    s2 = s2_ref[...]
    t12 = t12_ref[...]
    tb = x_ref.shape[0]
    for i in range(tb):                       # static unroll; TB is small
        y = jnp.dot(w, x_ref[i], preferred_element_type=jnp.float32)
        y = jnp.maximum(y + b, 0.0)           # conv bias + ReLU
        # TODO(synk): dropout is identity at inference; training-mode dropout
        # is not implemented.
        y = y * s12 + sc_ref[i].astype(jnp.float32) * s2 + t12
        o_ref[i] = y.astype(o_ref.dtype)


def _input_conv_noskip_kernel(x_ref, w_ref, b_ref, s12_ref, t12_ref, o_ref):
    w = w_ref[...]
    b = b_ref[...]
    s12 = s12_ref[...]
    t12 = t12_ref[...]
    tb = x_ref.shape[0]
    for i in range(tb):
        y = jnp.dot(w, x_ref[i], preferred_element_type=jnp.float32)
        y = jnp.maximum(y + b, 0.0)
        o_ref[i] = (y * s12 + t12).astype(o_ref.dtype)


def input_conv_forward(x, sc, params, *, skip=True, tb=8, tl=512,
                       out_dtype=None, eps=1e-3):
    """x: (N, Cin, L), sc: (N, Cout, L) (PyTorch NCL).  Returns (N, Cout, L)."""
    N, Cin, L = x.shape
    Cout, Cin_w = params["w"].shape
    assert Cin_w == Cin
    out_dtype = out_dtype or x.dtype
    f32 = jnp.float32

    # Fold BatchNorm (inference, running stats) into per-channel scale/shift,
    # then pre-compose bn1/bn2 and the skip scale.
    s1 = params["bn1_gamma"].astype(f32) / jnp.sqrt(params["bn1_var"].astype(f32) + eps)
    t1 = params["bn1_beta"].astype(f32) - params["bn1_mean"].astype(f32) * s1
    s2 = params["bn2_gamma"].astype(f32) / jnp.sqrt(params["bn2_var"].astype(f32) + eps)
    t2 = params["bn2_beta"].astype(f32) - params["bn2_mean"].astype(f32) * s2
    s12 = (s1 * s2).reshape(Cout, 1)            # bn1 then bn2 scale
    t12 = (t1 * s2 + t2).reshape(Cout, 1)       # bn1 then bn2 shift
    s2c = s2.reshape(Cout, 1)                   # scale applied to the skip path
    bias = params["b"].astype(f32).reshape(Cout, 1)

    w = params["w"].astype(x.dtype)             # (Cout, Cin)

    # Lane tile along L: full L when small; otherwise a wide tile that is a
    # multiple of 128, with a masked tail block (grid = cdiv).
    if L <= tl:
        tl_eff = L
    else:
        assert tl % 128 == 0, "tl must be a multiple of 128 when tiling L"
        tl_eff = tl

    # Batch tile: amortize per-grid-step overhead, but keep the double-buffered
    # working set small so the default scoped-VMEM limit is never an issue.
    it_x = jnp.dtype(x.dtype).itemsize
    it_o = jnp.dtype(out_dtype).itemsize
    it_sc = jnp.dtype(sc.dtype).itemsize if skip else 0
    bytes_per_b = tl_eff * (Cin * it_x + Cout * it_sc + Cout * it_o)
    budget = 8 * 1024 * 1024                    # ~8 MiB per buffer set (x2 dbl-buf)
    tb_eff = max(1, min(tb, N, budget // max(1, 2 * bytes_per_b)))

    grid = (pl.cdiv(N, tb_eff), pl.cdiv(L, tl_eff))

    x_spec = pl.BlockSpec((tb_eff, Cin, tl_eff), lambda n, j: (n, 0, j))
    o_spec = pl.BlockSpec((tb_eff, Cout, tl_eff), lambda n, j: (n, 0, j))
    w_spec = pl.BlockSpec((Cout, Cin), lambda n, j: (0, 0))
    col_spec = pl.BlockSpec((Cout, 1), lambda n, j: (0, 0))

    compiler_params = pltpu.CompilerParams(
        dimension_semantics=("parallel", "parallel"))

    if skip:
        sc_spec = pl.BlockSpec((tb_eff, Cout, tl_eff), lambda n, j: (n, 0, j))
        return pl.pallas_call(
            _input_conv_skip_kernel,
            out_shape=jax.ShapeDtypeStruct((N, Cout, L), out_dtype),
            grid=grid,
            in_specs=[x_spec, sc_spec, w_spec, col_spec, col_spec, col_spec,
                      col_spec],
            out_specs=o_spec,
            compiler_params=compiler_params,
        )(x, sc, w, bias, s12, s2c, t12)
    else:
        # Specialized no-skip variant: no sc stream, no zeros materialization.
        return pl.pallas_call(
            _input_conv_noskip_kernel,
            out_shape=jax.ShapeDtypeStruct((N, Cout, L), out_dtype),
            grid=grid,
            in_specs=[x_spec, w_spec, col_spec, col_spec, col_spec],
            out_specs=o_spec,
            compiler_params=compiler_params,
        )(x, w, bias, s12, t12)


def _reference_forward(x, sc, params, *, skip=True):
    eps = 1e-3
    w = params["w"]                                        # (Cout, Cin)
    y = jnp.einsum("oc,ncl->nol", w, x) + params["b"][None, :, None]
    y = jnp.maximum(y, 0.0)

    def bn(v, g, b, m, var):
        return (v - m[None, :, None]) / jnp.sqrt(var[None, :, None] + eps) \
               * g[None, :, None] + b[None, :, None]

    y = bn(y, params["bn1_gamma"], params["bn1_beta"],
           params["bn1_mean"], params["bn1_var"])
    if skip:
        y = sc + y
    return bn(y, params["bn2_gamma"], params["bn2_beta"],
              params["bn2_mean"], params["bn2_var"])


if __name__ == "__main__":
    key = jax.random.PRNGKey(0)
    N, Cin, Cout, L = 2, 4, 32, 16

    ks = jax.random.split(key, 16)
    params = {
        "w": jax.random.normal(ks[0], (Cout, Cin), jnp.float32) * 0.3,
        "b": jax.random.normal(ks[1], (Cout,), jnp.float32) * 0.1,
        "bn1_gamma": 1.0 + 0.1 * jax.random.normal(ks[2], (Cout,), jnp.float32),
        "bn1_beta": 0.1 * jax.random.normal(ks[3], (Cout,), jnp.float32),
        "bn1_mean": 0.1 * jax.random.normal(ks[4], (Cout,), jnp.float32),
        "bn1_var": jnp.abs(1.0 + 0.1 * jax.random.normal(ks[5], (Cout,), jnp.float32)),
        "bn2_gamma": 1.0 + 0.1 * jax.random.normal(ks[6], (Cout,), jnp.float32),
        "bn2_beta": 0.1 * jax.random.normal(ks[7], (Cout,), jnp.float32),
        "bn2_mean": 0.1 * jax.random.normal(ks[8], (Cout,), jnp.float32),
        "bn2_var": jnp.abs(1.0 + 0.1 * jax.random.normal(ks[9], (Cout,), jnp.float32)),
    }

    x = jax.random.normal(ks[10], (N, Cin, L), jnp.float32)
    sc = jax.random.normal(ks[11], (N, Cout, L), jnp.float32)

    # skip=True
    out = jax.block_until_ready(input_conv_forward(x, sc, params, skip=True))
    ref = _reference_forward(x, sc, params, skip=True)
    assert out.shape == (N, Cout, L)
    assert jnp.allclose(out, ref, atol=1e-4, rtol=1e-4), "mismatch vs reference"

    # skip=False (specialized kernel, no sc stream)
    out_ns = jax.block_until_ready(input_conv_forward(x, sc, params, skip=False))
    ref_ns = _reference_forward(x, sc, params, skip=False)
    assert jnp.allclose(out_ns, ref_ns, atol=1e-4, rtol=1e-4), "mismatch (skip=False)"

    # Masked-tail path along L: L not a multiple of the lane tile.
    L2 = 200
    x2 = jax.random.normal(ks[12], (N, Cin, L2), jnp.float32)
    sc2 = jax.random.normal(ks[13], (N, Cout, L2), jnp.float32)
    out_t = jax.block_until_ready(
        input_conv_forward(x2, sc2, params, skip=True, tl=128))
    ref_t = _reference_forward(x2, sc2, params, skip=True)
    assert out_t.shape == (N, Cout, L2)
    assert jnp.allclose(out_t, ref_t, atol=1e-4, rtol=1e-4), "mismatch (L tail)"

    # Masked-tail path along the batch dimension: N not a multiple of tb.
    N3 = 3
    x3 = jax.random.normal(ks[14], (N3, Cin, L), jnp.float32)
    sc3 = jax.random.normal(ks[15], (N3, Cout, L), jnp.float32)
    out_b = jax.block_until_ready(
        input_conv_forward(x3, sc3, params, skip=True, tb=2))
    ref_b = _reference_forward(x3, sc3, params, skip=True)
    assert out_b.shape == (N3, Cout, L)
    assert jnp.allclose(out_b, ref_b, atol=1e-4, rtol=1e-4), "mismatch (N tail)"

    print("KERNEL_OK")
</pallas_src>

<mosaic_0001>
module attributes {stable_mosaic.version = 11 : i64} {
  func.func @_input_conv_skip_kernel(%arg0: i32, %arg1: i32, %arg2: memref<2x4x16xf32, #tpu.memory_space<vmem>>, %arg3: memref<2x32x16xf32, #tpu.memory_space<vmem>>, %arg4: memref<32x4xf32, #tpu.memory_space<vmem>>, %arg5: memref<32x1xf32, #tpu.memory_space<vmem>>, %arg6: memref<32x1xf32, #tpu.memory_space<vmem>>, %arg7: memref<32x1xf32, #tpu.memory_space<vmem>>, %arg8: memref<32x1xf32, #tpu.memory_space<vmem>>, %arg9: memref<2x32x16xf32, #tpu.memory_space<vmem>>) attributes {dimension_semantics = [#tpu.dimension_semantics<parallel>, #tpu.dimension_semantics<parallel>], iteration_bounds = array<i64: 1, 1>, scalar_prefetch = 0 : i64, scratch_operands = 0 : i64, tpu.core_type = #tpu.core_type<tc>, window_params = [{transform_indices = @transform_0, window_bounds = array<i64: 2, 4, 16>}, {transform_indices = @transform_1, window_bounds = array<i64: 2, 32, 16>}, {pipeline_mode = #tpu.pipeline_mode<synchronous>, transform_indices = @transform_2, window_bounds = array<i64: 32, 4>}, {pipeline_mode = #tpu.pipeline_mode<synchronous>, transform_indices = @transform_3, window_bounds = array<i64: 32, 1>}, {pipeline_mode = #tpu.pipeline_mode<synchronous>, transform_indices = @transform_4, window_bounds = array<i64: 32, 1>}, {pipeline_mode = #tpu.pipeline_mode<synchronous>, transform_indices = @transform_5, window_bounds = array<i64: 32, 1>}, {pipeline_mode = #tpu.pipeline_mode<synchronous>, transform_indices = @transform_6, window_bounds = array<i64: 32, 1>}, {transform_indices = @transform_7, window_bounds = array<i64: 2, 32, 16>}]} {
    %c0 = arith.constant 0 : index
    %c0_0 = arith.constant 0 : index
    %0 = vector.load %arg4[%c0, %c0_0] : memref<32x4xf32, #tpu.memory_space<vmem>>, vector<32x4xf32>
    %c0_1 = arith.constant 0 : index
    %c0_2 = arith.constant 0 : index
    %1 = vector.load %arg5[%c0_1, %c0_2] : memref<32x1xf32, #tpu.memory_space<vmem>>, vector<32x1xf32>
    %c0_3 = arith.constant 0 : index
    %c0_4 = arith.constant 0 : index
    %2 = vector.load %arg6[%c0_3, %c0_4] : memref<32x1xf32, #tpu.memory_space<vmem>>, vector<32x1xf32>
    %c0_5 = arith.constant 0 : index
    %c0_6 = arith.constant 0 : index
    %3 = vector.load %arg7[%c0_5, %c0_6] : memref<32x1xf32, #tpu.memory_space<vmem>>, vector<32x1xf32>
    %c0_7 = arith.constant 0 : index
    %c0_8 = arith.constant 0 : index
    %4 = vector.load %arg8[%c0_7, %c0_8] : memref<32x1xf32, #tpu.memory_space<vmem>>, vector<32x1xf32>
    %c0_9 = arith.constant 0 : index
    %c0_10 = arith.constant 0 : index
    %c0_11 = arith.constant 0 : index
    %5 = vector.load %arg2[%c0_9, %c0_10, %c0_11] : memref<2x4x16xf32, #tpu.memory_space<vmem>>, vector<1x4x16xf32>
    %6 = vector.shape_cast %5 : vector<1x4x16xf32> to vector<4x16xf32>
    %cst = arith.constant dense<0.000000e+00> : vector<32x16xf32>
    %7 = tpu.matmul %0, %6, %cst {dimension_numbers = #tpu.dot_dimension_numbers<[1], [0], [0], [1], [0, 0, 1, 1], [], []>} : vector<32x4xf32>, vector<4x16xf32>, vector<32x16xf32> -> vector<32x16xf32>
    %8 = vector.broadcast %1 : vector<32x1xf32> to vector<32x16xf32>
    %9 = arith.addf %7, %8 : vector<32x16xf32>
    %cst_12 = arith.constant 0.000000e+00 : f32
    %10 = vector.broadcast %cst_12 : f32 to vector<32x16xf32>
    %11 = arith.maximumf %9, %10 : vector<32x16xf32>
    %12 = vector.broadcast %2 : vector<32x1xf32> to vector<32x16xf32>
    %13 = arith.mulf %11, %12 : vector<32x16xf32>
    %c0_13 = arith.constant 0 : index
    %c0_14 = arith.constant 0 : index
    %c0_15 = arith.constant 0 : index
    %14 = vector.load %arg3[%c0_13, %c0_14, %c0_15] : memref<2x32x16xf32, #tpu.memory_space<vmem>>, vector<1x32x16xf32>
    %15 = vector.shape_cast %14 : vector<1x32x16xf32> to vector<32x16xf32>
    %16 = vector.broadcast %3 : vector<32x1xf32> to vector<32x16xf32>
    %17 = arith.mulf %15, %16 : vector<32x16xf32>
    %18 = arith.addf %13, %17 : vector<32x16xf32>
    %19 = vector.broadcast %4 : vector<32x1xf32> to vector<32x16xf32>
    %20 = arith.addf %18, %19 : vector<32x16xf32>
    %c0_16 = arith.constant 0 : index
    %c0_17 = arith.constant 0 : index
    %c0_18 = arith.constant 0 : index
    %21 = vector.load %arg9[%c0_16, %c0_17, %c0_18] : memref<2x32x16xf32, #tpu.memory_space<vmem>>, vector<1x32x16xf32>
    %22 = vector.shape_cast %21 : vector<1x32x16xf32> to vector<32x16xf32>
    %23 = vector.shape_cast %20 : vector<32x16xf32> to vector<1x32x16xf32>
    tpu.vector_store %arg9[%c0_16, %c0_17, %c0_18], %23 {strides = array<i32>} : memref<2x32x16xf32, #tpu.memory_space<vmem>>, vector<1x32x16xf32>,
    %c1 = arith.constant 1 : index
    %c0_19 = arith.constant 0 : index
    %c0_20 = arith.constant 0 : index
    %24 = vector.load %arg2[%c1, %c0_19, %c0_20] : memref<2x4x16xf32, #tpu.memory_space<vmem>>, vector<1x4x16xf32>
    %25 = vector.shape_cast %24 : vector<1x4x16xf32> to vector<4x16xf32>
    %cst_21 = arith.constant dense<0.000000e+00> : vector<32x16xf32>
    %26 = tpu.matmul %0, %25, %cst_21 {dimension_numbers = #tpu.dot_dimension_numbers<[1], [0], [0], [1], [0, 0, 1, 1], [], []>} : vector<32x4xf32>, vector<4x16xf32>, vector<32x16xf32> -> vector<32x16xf32>
    %27 = vector.broadcast %1 : vector<32x1xf32> to vector<32x16xf32>
    %28 = arith.addf %26, %27 : vector<32x16xf32>
    %cst_22 = arith.constant 0.000000e+00 : f32
    %29 = vector.broadcast %cst_22 : f32 to vector<32x16xf32>
    %30 = arith.maximumf %28, %29 : vector<32x16xf32>
    %31 = vector.broadcast %2 : vector<32x1xf32> to vector<32x16xf32>
    %32 = arith.mulf %30, %31 : vector<32x16xf32>
    %c1_23 = arith.constant 1 : index
    %c0_24 = arith.constant 0 : index
    %c0_25 = arith.constant 0 : index
    %33 = vector.load %arg3[%c1_23, %c0_24, %c0_25] : memref<2x32x16xf32, #tpu.memory_space<vmem>>, vector<1x32x16xf32>
    %34 = vector.shape_cast %33 : vector<1x32x16xf32> to vector<32x16xf32>
    %35 = vector.broadcast %3 : vector<32x1xf32> to vector<32x16xf32>
    %36 = arith.mulf %34, %35 : vector<32x16xf32>
    %37 = arith.addf %32, %36 : vector<32x16xf32>
    %38 = vector.broadcast %4 : vector<32x1xf32> to vector<32x16xf32>
    %39 = arith.addf %37, %38 : vector<32x16xf32>
    %c1_26 = arith.constant 1 : index
    %c0_27 = arith.constant 0 : index
    %c0_28 = arith.constant 0 : index
    %40 = vector.load %arg9[%c1_26, %c0_27, %c0_28] : memref<2x32x16xf32, #tpu.memory_space<vmem>>, vector<1x32x16xf32>
    %41 = vector.shape_cast %40 : vector<1x32x16xf32> to vector<32x16xf32>
    %42 = vector.shape_cast %39 : vector<32x16xf32> to vector<1x32x16xf32>
    tpu.vector_store %arg9[%c1_26, %c0_27, %c0_28], %42 {strides = array<i32>} : memref<2x32x16xf32, #tpu.memory_space<vmem>>, vector<1x32x16xf32>,
    return
  }
  func.func @transform_0(%arg0: i32, %arg1: i32) -> (i32, i32, i32) {
    %c0_i32 = arith.constant 0 : i32
    %c0_i32_0 = arith.constant 0 : i32
    return %arg0, %c0_i32, %arg1 : i32, i32, i32
  }
  func.func @transform_1(%arg0: i32, %arg1: i32) -> (i32, i32, i32) {
    %c0_i32 = arith.constant 0 : i32
    %c0_i32_0 = arith.constant 0 : i32
    return %arg0, %c0_i32, %arg1 : i32, i32, i32
  }
  func.func @transform_2(%arg0: i32, %arg1: i32) -> (i32, i32) {
    %c0_i32 = arith.constant 0 : i32
    %c0_i32_0 = arith.constant 0 : i32
    %c0_i32_1 = arith.constant 0 : i32
    return %c0_i32, %c0_i32_0 : i32, i32
  }
  func.func @transform_3(%arg0: i32, %arg1: i32) -> (i32, i32) {
    %c0_i32 = arith.constant 0 : i32
    %c0_i32_0 = arith.constant 0 : i32
    %c0_i32_1 = arith.constant 0 : i32
    return %c0_i32, %c0_i32_0 : i32, i32
  }
  func.func @transform_4(%arg0: i32, %arg1: i32) -> (i32, i32) {
    %c0_i32 = arith.constant 0 : i32
    %c0_i32_0 = arith.constant 0 : i32
    %c0_i32_1 = arith.constant 0 : i32
    return %c0_i32, %c0_i32_0 : i32, i32
  }
  func.func @transform_5(%arg0: i32, %arg1: i32) -> (i32, i32) {
    %c0_i32 = arith.constant 0 : i32
    %c0_i32_0 = arith.constant 0 : i32
    %c0_i32_1 = arith.constant 0 : i32
    return %c0_i32, %c0_i32_0 : i32, i32
  }
  func.func @transform_6(%arg0: i32, %arg1: i32) -> (i32, i32) {
    %c0_i32 = arith.constant 0 : i32
    %c0_i32_0 = arith.constant 0 : i32
    %c0_i32_1 = arith.constant 0 : i32
    return %c0_i32, %c0_i32_0 : i32, i32
  }
  func.func @transform_7(%arg0: i32, %arg1: i32) -> (i32, i32, i32) {
    %c0_i32 = arith.constant 0 : i32
    %c0_i32_0 = arith.constant 0 : i32
    return %arg0, %c0_i32, %arg1 : i32, i32, i32
  }
}

</mosaic_0001>

<llo_original>
// kernel: tpu_custom_call.1
$region0: #{tpu_custom_call.1}
  #allocation0 [shape = 'u32[]', space=smem, size = 0x4, offset = 0x4, fixed_abs, tag = 'smem constant byte address 0x4 - core index']
  #allocation1 [shape = 'u32[72,128]{1,0:T(1,128)}', space=vmem, size = 0x9000, scoped, tag = 'internal scratch']
  %s0 = inlined_call_operand.vmem [shape: f32[2,4,16], index: 0, kind: input, shape index: {}]
  %s1 = inlined_call_operand.vmem [shape: f32[2,32,16], index: 1, kind: input, shape index: {}]
  %s2 = inlined_call_operand.vmem [shape: f32[32,4], index: 2, kind: input, shape index: {}]
  %s3 = inlined_call_operand.vmem [shape: f32[32,1], index: 3, kind: input, shape index: {}]
  %s4 = inlined_call_operand.vmem [shape: f32[32,1], index: 4, kind: input, shape index: {}]
  %s5 = inlined_call_operand.vmem [shape: f32[32,1], index: 5, kind: input, shape index: {}]
  %s6 = inlined_call_operand.vmem [shape: f32[32,1], index: 6, kind: input, shape index: {}]
  %s7 = inlined_call_operand.vmem [shape: f32[2,32,16], index: 7, kind: output, shape index: {}]
  %s8 = sld [smem:[#allocation0]]
  $region38: #{tpu_custom_call.1} parent=0
    _
  %s10 = ssub.s32 1, %s8
  %s11 = scalar_select 0, %s10, %s8
  // Predicated region
  $region2: #{tpu_custom_call.1} parent=0 // pred_check
    _
  $region3: #{tpu_custom_call.1} parent=0 // pred_check_branch
    %13 = sbr.rel (0) target = $region5
  $region4: #{tpu_custom_call.1} parent=0 // pred_region
    _
  $region5: #{tpu_custom_call.1} parent=0 // pred_fallthru
    _
  // Predicated region
  $region6: #{tpu_custom_call.1} parent=0 // pred_check
    _
  $region7: #{tpu_custom_call.1} parent=0 // pred_check_branch
    %15 = sbr.rel (0) target = $region9
  $region8: #{tpu_custom_call.1} parent=0 // pred_region
    _
  $region9: #{tpu_custom_call.1} parent=0 // pred_fallthru
    _
  // Predicated region
  $region10: #{tpu_custom_call.1} parent=0 // pred_check
    _
  $region11: #{tpu_custom_call.1} parent=0 // pred_check_branch
    %17 = sbr.rel (0) target = $region13
  $region12: #{tpu_custom_call.1} parent=0 // pred_region
    _
  $region13: #{tpu_custom_call.1} parent=0 // pred_fallthru
    _
  // Predicated region
  $region14: #{tpu_custom_call.1} parent=0 // pred_check
    _
  $region15: #{tpu_custom_call.1} parent=0 // pred_check_branch
    %19 = sbr.rel (0) target = $region17
  $region16: #{tpu_custom_call.1} parent=0 // pred_region
    _
  $region17: #{tpu_custom_call.1} parent=0 // pred_fallthru
    _
  // Predicated region
  $region18: #{tpu_custom_call.1} parent=0 // pred_check
    _
  $region19: #{tpu_custom_call.1} parent=0 // pred_check_branch
    %21 = sbr.rel (0) target = $region21
  $region20: #{tpu_custom_call.1} parent=0 // pred_region
    _
  $region21: #{tpu_custom_call.1} parent=0 // pred_fallthru
    _
  // Predicated region
  $region22: #{tpu_custom_call.1} parent=0 // pred_check
    _
  $region23: #{tpu_custom_call.1} parent=0 // pred_check_branch
    %23 = sbr.rel (0) target = $region25
  $region24: #{tpu_custom_call.1} parent=0 // pred_region
    _
  $region25: #{tpu_custom_call.1} parent=0 // pred_fallthru
    _
  // Predicated region
  $region26: #{tpu_custom_call.1} parent=0 // pred_check
    _
  $region27: #{tpu_custom_call.1} parent=0 // pred_check_branch
    %25 = sbr.rel (0) target = $region29
  $region28: #{tpu_custom_call.1} parent=0 // pred_region
    _
  $region29: #{tpu_custom_call.1} parent=0 // pred_fallthru
    _
  %v26 = vld [vmem:[%s2] sm:$0xff]
  %v27 = vld [vmem:[%s2 + $0x8] sm:$0xff]
  %v28 = vld [vmem:[%s2 + $0x10] sm:$0xff]
  %v29 = vld [vmem:[%s2 + $0x18] sm:$0xff]
  %v30 = vld [vmem:[%s3] sm:$0xff]
  %v31 = vld [vmem:[%s3 + $0x8] sm:$0xff]
  %v32 = vld [vmem:[%s3 + $0x10] sm:$0xff]
  %v33 = vld [vmem:[%s3 + $0x18] sm:$0xff]
  %v34 = vld [vmem:[%s4] sm:$0xff]
  %v35 = vld [vmem:[%s4 + $0x8] sm:$0xff]
  %v36 = vld [vmem:[%s4 + $0x10] sm:$0xff]
  %v37 = vld [vmem:[%s4 + $0x18] sm:$0xff]
  %v38 = vld [vmem:[%s5] sm:$0xff]
  %v39 = vld [vmem:[%s5 + $0x8] sm:$0xff]
  %v40 = vld [vmem:[%s5 + $0x10] sm:$0xff]
  %v41 = vld [vmem:[%s5 + $0x18] sm:$0xff]
  %v42 = vld [vmem:[%s6] sm:$0xff]
  %v43 = vld [vmem:[%s6 + $0x8] sm:$0xff]
  %v44 = vld [vmem:[%s6 + $0x10] sm:$0xff]
  %v45 = vld [vmem:[%s6 + $0x18] sm:$0xff]
  %v46 = vld [vmem:[%s0] sm:$0xf]
  %48 = vset.pattern.permute.xlu0 0
  %49 = vperm.xlu0 %48, %v30
  %v50 = vpop.permute.xlu0 %49
  %53 = vset.pattern.permute.xlu0 0
  %54 = vperm.xlu0 %53, %v31
  %v55 = vpop.permute.xlu0 %54
  %58 = vset.pattern.permute.xlu0 0
  %59 = vperm.xlu0 %58, %v32
  %v60 = vpop.permute.xlu0 %59
  %63 = vset.pattern.permute.xlu0 0
  %64 = vperm.xlu0 %63, %v33
  %v65 = vpop.permute.xlu0 %64
  %vm67 = vcmask 31744
  %v69 = vsel %vm67, %v26, 0
  %v72 = vsel %vm67, %v27, 0
  %v75 = vsel %vm67, %v28, 0
  %v78 = vsel %vm67, %v29, 0
  %vm80 = vcmask 1043456
  %v82 = vsel %vm80, %v46, 0
  %84 = vmatpush.msra.mxu0 0.0
  %85 = vmatpush.msra.mxu0 0.0
  %86 = vmatpush.msra.mxu0 0.0
  %87 = vmatpush.msra.mxu0 0.0
  %88 = vmatpush.msra.mxu0 0.0
  %89 = vmatpush.msra.mxu0 0.0
  %90 = vmatpush.msra.mxu0 0.0
  %91 = vmatpush.msra.mxu0 0.0
  %92 = vmatpush.msra.mxu0 0.0
  %93 = vmatpush.msra.mxu0 0.0
  %94 = vmatpush.msra.mxu0 0.0
  %95 = vmatpush.msra.mxu0 0.0
  %96 = vmatpush.msra.mxu0 0.0
  %97 = vmatpush.msra.mxu0 0.0
  %98 = vmatpush.msra.mxu0 0.0
  %99 = vmatpush.msra.mxu0 %v82
  %100 = vmatmul.f32.gmra.mxu0 %v69
  %v101 = vpop.f32.mrf.mxu0
  %v102 = vadd.f32 %v50, %v101
  %103 = vmatmul.f32.gmra.mxu0 %v72
  %v104 = vpop.f32.mrf.mxu0
  %v105 = vadd.f32 %v55, %v104
  %106 = vmatmul.f32.gmra.mxu0 %v75
  %v107 = vpop.f32.mrf.mxu0
  %v108 = vadd.f32 %v60, %v107
  %109 = vmatmul.f32.gmra.mxu0 %v78
  %v110 = vpop.f32.mrf.mxu0
  %v111 = vadd.f32 %v65, %v110
  %112 = vdwg.mxu0
  %v113 = vmax.f32 %v102, 0.0
  %v114 = vmax.f32 %v105, 0.0
  %v115 = vmax.f32 %v108, 0.0
  %v116 = vmax.f32 %v111, 0.0
  %118 = vset.pattern.permute.xlu0 0
  %119 = vperm.xlu0 %118, %v34
  %v120 = vpop.permute.xlu0 %119
  %123 = vset.pattern.permute.xlu0 0
  %124 = vperm.xlu0 %123, %v35
  %v125 = vpop.permute.xlu0 %124
  %128 = vset.pattern.permute.xlu0 0
  %129 = vperm.xlu0 %128, %v36
  %v130 = vpop.permute.xlu0 %129
  %133 = vset.pattern.permute.xlu0 0
  %134 = vperm.xlu0 %133, %v37
  %v135 = vpop.permute.xlu0 %134
  %v137 = vmul.f32 %v113, %v120
  %v138 = vmul.f32 %v114, %v125
  %v139 = vmul.f32 %v115, %v130
  %v140 = vmul.f32 %v116, %v135
  %v141 = vld [vmem:[%s1] sm:$0xff]
  %v142 = vld [vmem:[%s1 + $0x8] sm:$0xff]
  %v143 = vld [vmem:[%s1 + $0x10] sm:$0xff]
  %v144 = vld [vmem:[%s1 + $0x18] sm:$0xff]
  %146 = vset.pattern.permute.xlu0 0
  %147 = vperm.xlu0 %146, %v38
  %v148 = vpop.permute.xlu0 %147
  %151 = vset.pattern.permute.xlu0 0
  %152 = vperm.xlu0 %151, %v39
  %v153 = vpop.permute.xlu0 %152
  %156 = vset.pattern.permute.xlu0 0
  %157 = vperm.xlu0 %156, %v40
  %v158 = vpop.permute.xlu0 %157
  %161 = vset.pattern.permute.xlu0 0
  %162 = vperm.xlu0 %161, %v41
  %v163 = vpop.permute.xlu0 %162
  %v165 = vmul.f32 %v141, %v148
  %v166 = vmul.f32 %v142, %v153
  %v167 = vmul.f32 %v143, %v158
  %v168 = vmul.f32 %v144, %v163
  %v169 = vadd.f32 %v137, %v165
  %v170 = vadd.f32 %v138, %v166
  %v171 = vadd.f32 %v139, %v167
  %v172 = vadd.f32 %v140, %v168
  %174 = vset.pattern.permute.xlu0 0
  %175 = vperm.xlu0 %174, %v42
  %v176 = vpop.permute.xlu0 %175
  %179 = vset.pattern.permute.xlu0 0
  %180 = vperm.xlu0 %179, %v43
  %v181 = vpop.permute.xlu0 %180
  %184 = vset.pattern.permute.xlu0 0
  %185 = vperm.xlu0 %184, %v44
  %v186 = vpop.permute.xlu0 %185
  %189 = vset.pattern.permute.xlu0 0
  %190 = vperm.xlu0 %189, %v45
  %v191 = vpop.permute.xlu0 %190
  %v193 = vadd.f32 %v169, %v176
  %v194 = vadd.f32 %v170, %v181
  %v195 = vadd.f32 %v171, %v186
  %v196 = vadd.f32 %v172, %v191
  %vm197 = vcmask 130048
  %198 = vst.msk [vmem:[%s7] sm:$0xff] %vm197, %v193
  %199 = vst.msk [vmem:[%s7 + $0x8] sm:$0xff] %vm197, %v194
  %200 = vst.msk [vmem:[%s7 + $0x10] sm:$0xff] %vm197, %v195
  %201 = vst.msk [vmem:[%s7 + $0x18] sm:$0xff] %vm197, %v196
  %s202 = scalar_lea.vmem %s0, 4
  %v203 = vld [vmem:[%s202] sm:$0xf]
  %v205 = vsel %vm80, %v203, 0
  %207 = vmatpush.msra.mxu0 0.0
  %208 = vmatpush.msra.mxu0 0.0
  %209 = vmatpush.msra.mxu0 0.0
  %210 = vmatpush.msra.mxu0 0.0
  %211 = vmatpush.msra.mxu0 0.0
  %212 = vmatpush.msra.mxu0 0.0
  %213 = vmatpush.msra.mxu0 0.0
  %214 = vmatpush.msra.mxu0 0.0
  %215 = vmatpush.msra.mxu0 0.0
  %216 = vmatpush.msra.mxu0 0.0
  %217 = vmatpush.msra.mxu0 0.0
  %218 = vmatpush.msra.mxu0 0.0
  %219 = vmatpush.msra.mxu0 0.0
  %220 = vmatpush.msra.mxu0 0.0
  %221 = vmatpush.msra.mxu0 0.0
  %222 = vmatpush.msra.mxu0 %v205
  %223 = vmatmul.f32.gmra.mxu0 %v69
  %v224 = vpop.f32.mrf.mxu0
  %v225 = vadd.f32 %v50, %v224
  %226 = vmatmul.f32.gmra.mxu0 %v72
  %v227 = vpop.f32.mrf.mxu0
  %v228 = vadd.f32 %v55, %v227
  %229 = vmatmul.f32.gmra.mxu0 %v75
  %v230 = vpop.f32.mrf.mxu0
  %v231 = vadd.f32 %v60, %v230
  %232 = vmatmul.f32.gmra.mxu0 %v78
  %v233 = vpop.f32.mrf.mxu0
  %v234 = vadd.f32 %v65, %v233
  %235 = vdwg.mxu0
  %v236 = vmax.f32 %v225, 0.0
  %v237 = vmax.f32 %v228, 0.0
  %v238 = vmax.f32 %v231, 0.0
  %v239 = vmax.f32 %v234, 0.0
  %v240 = vmul.f32 %v236, %v120
  %v241 = vmul.f32 %v237, %v125
  %v242 = vmul.f32 %v238, %v130
  %v243 = vmul.f32 %v239, %v135
  %s244 = scalar_lea.vmem %s1, 32
  %v245 = vld [vmem:[%s244] sm:$0xff]
  %v246 = vld [vmem:[%s244 + $0x8] sm:$0xff]
  %v247 = vld [vmem:[%s244 + $0x10] sm:$0xff]
  %v248 = vld [vmem:[%s244 + $0x18] sm:$0xff]
  %v249 = vmul.f32 %v245, %v148
  %v250 = vmul.f32 %v246, %v153
  %v251 = vmul.f32 %v247, %v158
  %v252 = vmul.f32 %v248, %v163
  %v253 = vadd.f32 %v240, %v249
  %v254 = vadd.f32 %v241, %v250
  %v255 = vadd.f32 %v242, %v251
  %v256 = vadd.f32 %v243, %v252
  %v257 = vadd.f32 %v253, %v176
  %v258 = vadd.f32 %v254, %v181
  %v259 = vadd.f32 %v255, %v186
  %v260 = vadd.f32 %v256, %v191
  %s261 = scalar_lea.vmem %s7, 32
  %262 = vst.msk [vmem:[%s261] sm:$0xff] %vm197, %v257
  %263 = vst.msk [vmem:[%s261 + $0x8] sm:$0xff] %vm197, %v258
  %264 = vst.msk [vmem:[%s261 + $0x10] sm:$0xff] %vm197, %v259
  %265 = vst.msk [vmem:[%s261 + $0x18] sm:$0xff] %vm197, %v260
  // Predicated region
  $region30: #{tpu_custom_call.1} parent=0 // pred_check
    _
  $region31: #{tpu_custom_call.1} parent=0 // pred_check_branch
    %267 = sbr.rel (0) target = $region33
  $region32: #{tpu_custom_call.1} parent=0 // pred_region
    _
  $region33: #{tpu_custom_call.1} parent=0 // pred_fallthru
    _
  // Predicated region
  $region34: #{tpu_custom_call.1} parent=0 // pred_check
    _
  $region35: #{tpu_custom_call.1} parent=0 // pred_check_branch
    %269 = sbr.rel (0) target = $region37
  $region36: #{tpu_custom_call.1} parent=0 // pred_region
    _
  $region37: #{tpu_custom_call.1} parent=0 // pred_fallthru
    _

</llo_original>
